<compile_context>
chip_gen: v7x
topology: tpu7x:2x2x1
jax: 0.10.0
libtpu: 0.0.40
codegen_flags: <defaults>
</compile_context>

<pallas_src>
import functools

import jax
import jax.numpy as jnp
from jax.experimental import pallas as pl
from jax.experimental.pallas import tpu as pltpu

LANES = 128
SUBLANES = 8
MAX_TILE_ROWS = 512   # (TR, 128) f32 tile = 256 KiB; x2 inputs x2 buffers ~= 1 MiB


def _dice_kernel(threshold, logit_ref, label_ref,
                 inter_ref, pred_ref, lab_ref,
                 i_acc, p_acc, l_acc):
    """One (TR, 128) row tile of one image per grid step."""
    t = pl.program_id(1)

    @pl.when(t == 0)
    def _():
        i_acc[...] = jnp.zeros_like(i_acc)
        p_acc[...] = jnp.zeros_like(p_acc)
        l_acc[...] = jnp.zeros_like(l_acc)

    x = logit_ref[0]                       # (TR, 128) f32
    y = label_ref[0]                       # (TR, 128) f32

    probs = jax.nn.sigmoid(x)              # EUP
    pred = (probs > threshold).astype(jnp.float32)
    inter = pred * y

    # Reduce over sublanes only; keep the 128 lanes dense.
    i_acc[...] += jnp.sum(inter, axis=0, keepdims=True)
    p_acc[...] += jnp.sum(pred, axis=0, keepdims=True)
    l_acc[...] += jnp.sum(y, axis=0, keepdims=True)

    @pl.when(t == pl.num_programs(1) - 1)
    def _():
        inter_ref[0] = i_acc[...]
        pred_ref[0] = p_acc[...]
        lab_ref[0] = l_acc[...]


def dice_score(logits, labels, threshold=0.5):
    """logits, labels: (B, C, H, W). Returns scalar mean dice score."""
    B = logits.shape[0]
    x = logits.reshape(B, -1).astype(jnp.float32)
    y = labels.reshape(B, -1).astype(jnp.float32)
    N = x.shape[1]

    # Pad to a lane-dense (R, 128) layout with R a multiple of the row tile.
    R = -(-N // LANES)
    R = -(-R // SUBLANES) * SUBLANES
    TR = min(R, MAX_TILE_ROWS)
    R = -(-R // TR) * TR
    N_pad = R * LANES
    if N_pad != N:
        # Pad logits very negative -> sigmoid ~ 0 -> predict 0; labels pad 0.
        x = jnp.pad(x, ((0, 0), (0, N_pad - N)), constant_values=-100.0)
        y = jnp.pad(y, ((0, 0), (0, N_pad - N)), constant_values=0.0)
    x3 = x.reshape(B, R, LANES)
    y3 = y.reshape(B, R, LANES)
    n_tiles = R // TR

    inter_p, pred_p, lab_p = pl.pallas_call(
        functools.partial(_dice_kernel, float(threshold)),
        out_shape=(
            jax.ShapeDtypeStruct((B, 1, LANES), jnp.float32),
            jax.ShapeDtypeStruct((B, 1, LANES), jnp.float32),
            jax.ShapeDtypeStruct((B, 1, LANES), jnp.float32),
        ),
        grid_spec=pltpu.PrefetchScalarGridSpec(
            num_scalar_prefetch=0,
            grid=(B, n_tiles),
            in_specs=[
                pl.BlockSpec((1, TR, LANES), lambda b, t: (b, t, 0)),
                pl.BlockSpec((1, TR, LANES), lambda b, t: (b, t, 0)),
            ],
            out_specs=(
                pl.BlockSpec((1, 1, LANES), lambda b, t: (b, 0, 0)),
                pl.BlockSpec((1, 1, LANES), lambda b, t: (b, 0, 0)),
                pl.BlockSpec((1, 1, LANES), lambda b, t: (b, 0, 0)),
            ),
            scratch_shapes=[pltpu.VMEM((1, LANES), jnp.float32)] * 3,
        ),
        compiler_params=pltpu.CompilerParams(
            dimension_semantics=("parallel", "arbitrary"),
            vmem_limit_bytes=32 * 1024 * 1024,
        ),
    )(x3, y3)

    inter = jnp.sum(inter_p[:, 0, :], axis=-1)   # (B,)
    pred = jnp.sum(pred_p[:, 0, :], axis=-1)     # (B,)
    lab = jnp.sum(lab_p[:, 0, :], axis=-1)       # (B,)
    score = 2.0 * inter / (pred + lab)
    return jnp.mean(score)


def _reference(logits, labels, threshold=0.5):
    """Pure-JAX mirror of the PyTorch DiceScore module."""
    B = logits.shape[0]
    probs = jax.nn.sigmoid(logits.reshape(B, -1).astype(jnp.float32))
    preds = (probs > threshold).astype(jnp.float32)
    labs = labels.reshape(B, -1).astype(jnp.float32)
    inter = (preds * labs).sum(1)
    score = 2.0 * inter / (preds.sum(1) + labs.sum(1))
    return score.mean()


if __name__ == "__main__":
    key = jax.random.PRNGKey(0)
    k_logit, k_label = jax.random.split(key)

    B, C, H, W = 2, 4, 16, 16
    logits = jax.random.normal(k_logit, (B, C, H, W), dtype=jnp.float32)
    labels = jax.random.bernoulli(k_label, 0.5, (B, C, H, W)).astype(jnp.float32)

    out = dice_score(logits, labels)
    out = jax.block_until_ready(out)

    ref = jax.block_until_ready(_reference(logits, labels))
    assert jnp.isfinite(out), "kernel produced non-finite score"
    assert abs(float(out) - float(ref)) < 1e-5, (float(out), float(ref))

    print("KERNEL_OK")
</pallas_src>

<mosaic_0001>
module attributes {stable_mosaic.version = 11 : i64} {
  func.func @_dice_kernel(%arg0: i32, %arg1: i32, %arg2: memref<1x8x128xf32, #tpu.memory_space<vmem>>, %arg3: memref<1x8x128xf32, #tpu.memory_space<vmem>>, %arg4: memref<1x1x128xf32, #tpu.memory_space<vmem>>, %arg5: memref<1x1x128xf32, #tpu.memory_space<vmem>>, %arg6: memref<1x1x128xf32, #tpu.memory_space<vmem>>, %arg7: memref<1x128xf32, #tpu.memory_space<vmem>>, %arg8: memref<1x128xf32, #tpu.memory_space<vmem>>, %arg9: memref<1x128xf32, #tpu.memory_space<vmem>>) attributes {dimension_semantics = [#tpu.dimension_semantics<parallel>, #tpu.dimension_semantics<arbitrary>], iteration_bounds = array<i64: 2, 1>, scalar_prefetch = 0 : i64, scratch_operands = 3 : i64, tpu.core_type = #tpu.core_type<tc>, window_params = [{transform_indices = @transform_0, window_bounds = array<i64: 1, 8, 128>}, {transform_indices = @transform_1, window_bounds = array<i64: 1, 8, 128>}, {transform_indices = @transform_2, window_bounds = array<i64: 1, 1, 128>}, {transform_indices = @transform_3, window_bounds = array<i64: 1, 1, 128>}, {transform_indices = @transform_4, window_bounds = array<i64: 1, 1, 128>}]} {
    %c0_i32 = arith.constant 0 : i32
    %0 = arith.cmpi eq, %arg1, %c0_i32 : i32
    %1 = arith.extui %0 : i1 to i32
    %c0_i32_0 = arith.constant 0 : i32
    %2 = arith.cmpi ne, %1, %c0_i32_0 : i32
    scf.if %2 {
      %cst_24 = arith.constant 0.000000e+00 : f32
      %35 = vector.broadcast %cst_24 : f32 to vector<1x128xf32>
      %c0_25 = arith.constant 0 : index
      %c0_26 = arith.constant 0 : index
      %36 = vector.load %arg7[%c0_25, %c0_26] : memref<1x128xf32, #tpu.memory_space<vmem>>, vector<1x128xf32>
      tpu.vector_store %arg7[%c0_25, %c0_26], %35 {strides = array<i32>} : memref<1x128xf32, #tpu.memory_space<vmem>>, vector<1x128xf32>,
      %cst_27 = arith.constant 0.000000e+00 : f32
      %37 = vector.broadcast %cst_27 : f32 to vector<1x128xf32>
      %c0_28 = arith.constant 0 : index
      %c0_29 = arith.constant 0 : index
      %38 = vector.load %arg8[%c0_28, %c0_29] : memref<1x128xf32, #tpu.memory_space<vmem>>, vector<1x128xf32>
      tpu.vector_store %arg8[%c0_28, %c0_29], %37 {strides = array<i32>} : memref<1x128xf32, #tpu.memory_space<vmem>>, vector<1x128xf32>,
      %cst_30 = arith.constant 0.000000e+00 : f32
      %39 = vector.broadcast %cst_30 : f32 to vector<1x128xf32>
      %c0_31 = arith.constant 0 : index
      %c0_32 = arith.constant 0 : index
      %40 = vector.load %arg9[%c0_31, %c0_32] : memref<1x128xf32, #tpu.memory_space<vmem>>, vector<1x128xf32>
      tpu.vector_store %arg9[%c0_31, %c0_32], %39 {strides = array<i32>} : memref<1x128xf32, #tpu.memory_space<vmem>>, vector<1x128xf32>,
    } else {
    }
    %c0 = arith.constant 0 : index
    %c0_1 = arith.constant 0 : index
    %c0_2 = arith.constant 0 : index
    %3 = vector.load %arg2[%c0, %c0_1, %c0_2] : memref<1x8x128xf32, #tpu.memory_space<vmem>>, vector<1x8x128xf32>
    %4 = vector.shape_cast %3 : vector<1x8x128xf32> to vector<8x128xf32>
    %c0_3 = arith.constant 0 : index
    %c0_4 = arith.constant 0 : index
    %c0_5 = arith.constant 0 : index
    %5 = vector.load %arg3[%c0_3, %c0_4, %c0_5] : memref<1x8x128xf32, #tpu.memory_space<vmem>>, vector<1x8x128xf32>
    %6 = vector.shape_cast %5 : vector<1x8x128xf32> to vector<8x128xf32>
    %7 = arith.negf %4 : vector<8x128xf32>
    %8 = math.exp %7 : vector<8x128xf32>
    %cst = arith.constant 1.000000e+00 : f32
    %9 = vector.broadcast %cst : f32 to vector<8x128xf32>
    %10 = arith.addf %9, %8 : vector<8x128xf32>
    %11 = arith.divf %9, %10 : vector<8x128xf32>
    %cst_6 = arith.constant 5.000000e-01 : f32
    %12 = vector.broadcast %cst_6 : f32 to vector<8x128xf32>
    %13 = arith.cmpf ogt, %11, %12 : vector<8x128xf32>
    %14 = arith.extui %13 : vector<8x128xi1> to vector<8x128xi32>
    %15 = arith.sitofp %14 : vector<8x128xi32> to vector<8x128xf32>
    %16 = arith.mulf %15, %6 : vector<8x128xf32>
    %c0_7 = arith.constant 0 : index
    %c0_8 = arith.constant 0 : index
    %17 = vector.load %arg7[%c0_7, %c0_8] : memref<1x128xf32, #tpu.memory_space<vmem>>, vector<1x128xf32>
    %cst_9 = arith.constant dense<0.000000e+00> : vector<128xf32>
    %18 = vector.multi_reduction <add>, %16, %cst_9 [0] : vector<8x128xf32> to vector<128xf32>
    %19 = vector.shape_cast %18 : vector<128xf32> to vector<1x128xf32>
    %20 = arith.addf %17, %19 : vector<1x128xf32>
    %c0_10 = arith.constant 0 : index
    %c0_11 = arith.constant 0 : index
    %21 = vector.load %arg7[%c0_10, %c0_11] : memref<1x128xf32, #tpu.memory_space<vmem>>, vector<1x128xf32>
    tpu.vector_store %arg7[%c0_10, %c0_11], %20 {strides = array<i32>} : memref<1x128xf32, #tpu.memory_space<vmem>>, vector<1x128xf32>,
    %c0_12 = arith.constant 0 : index
    %c0_13 = arith.constant 0 : index
    %22 = vector.load %arg8[%c0_12, %c0_13] : memref<1x128xf32, #tpu.memory_space<vmem>>, vector<1x128xf32>
    %cst_14 = arith.constant dense<0.000000e+00> : vector<128xf32>
    %23 = vector.multi_reduction <add>, %15, %cst_14 [0] : vector<8x128xf32> to vector<128xf32>
    %24 = vector.shape_cast %23 : vector<128xf32> to vector<1x128xf32>
    %25 = arith.addf %22, %24 : vector<1x128xf32>
    %c0_15 = arith.constant 0 : index
    %c0_16 = arith.constant 0 : index
    %26 = vector.load %arg8[%c0_15, %c0_16] : memref<1x128xf32, #tpu.memory_space<vmem>>, vector<1x128xf32>
    tpu.vector_store %arg8[%c0_15, %c0_16], %25 {strides = array<i32>} : memref<1x128xf32, #tpu.memory_space<vmem>>, vector<1x128xf32>,
    %c0_17 = arith.constant 0 : index
    %c0_18 = arith.constant 0 : index
    %27 = vector.load %arg9[%c0_17, %c0_18] : memref<1x128xf32, #tpu.memory_space<vmem>>, vector<1x128xf32>
    %cst_19 = arith.constant dense<0.000000e+00> : vector<128xf32>
    %28 = vector.multi_reduction <add>, %6, %cst_19 [0] : vector<8x128xf32> to vector<128xf32>
    %29 = vector.shape_cast %28 : vector<128xf32> to vector<1x128xf32>
    %30 = arith.addf %27, %29 : vector<1x128xf32>
    %c0_20 = arith.constant 0 : index
    %c0_21 = arith.constant 0 : index
    %31 = vector.load %arg9[%c0_20, %c0_21] : memref<1x128xf32, #tpu.memory_space<vmem>>, vector<1x128xf32>
    tpu.vector_store %arg9[%c0_20, %c0_21], %30 {strides = array<i32>} : memref<1x128xf32, #tpu.memory_space<vmem>>, vector<1x128xf32>,
    %c0_i32_22 = arith.constant 0 : i32
    %32 = arith.cmpi eq, %arg1, %c0_i32_22 : i32
    %33 = arith.extui %32 : i1 to i32
    %c0_i32_23 = arith.constant 0 : i32
    %34 = arith.cmpi ne, %33, %c0_i32_23 : i32
    scf.if %34 {
      %c0_24 = arith.constant 0 : index
      %c0_25 = arith.constant 0 : index
      %35 = vector.load %arg7[%c0_24, %c0_25] : memref<1x128xf32, #tpu.memory_space<vmem>>, vector<1x128xf32>
      %c0_26 = arith.constant 0 : index
      %c0_27 = arith.constant 0 : index
      %c0_28 = arith.constant 0 : index
      %36 = vector.load %arg4[%c0_26, %c0_27, %c0_28] : memref<1x1x128xf32, #tpu.memory_space<vmem>>, vector<1x1x128xf32>
      %37 = vector.shape_cast %36 : vector<1x1x128xf32> to vector<1x128xf32>
      %38 = vector.shape_cast %35 : vector<1x128xf32> to vector<1x1x128xf32>
      tpu.vector_store %arg4[%c0_26, %c0_27, %c0_28], %38 {strides = array<i32>} : memref<1x1x128xf32, #tpu.memory_space<vmem>>, vector<1x1x128xf32>,
      %c0_29 = arith.constant 0 : index
      %c0_30 = arith.constant 0 : index
      %39 = vector.load %arg8[%c0_29, %c0_30] : memref<1x128xf32, #tpu.memory_space<vmem>>, vector<1x128xf32>
      %c0_31 = arith.constant 0 : index
      %c0_32 = arith.constant 0 : index
      %c0_33 = arith.constant 0 : index
      %40 = vector.load %arg5[%c0_31, %c0_32, %c0_33] : memref<1x1x128xf32, #tpu.memory_space<vmem>>, vector<1x1x128xf32>
      %41 = vector.shape_cast %40 : vector<1x1x128xf32> to vector<1x128xf32>
      %42 = vector.shape_cast %39 : vector<1x128xf32> to vector<1x1x128xf32>
      tpu.vector_store %arg5[%c0_31, %c0_32, %c0_33], %42 {strides = array<i32>} : memref<1x1x128xf32, #tpu.memory_space<vmem>>, vector<1x1x128xf32>,
      %c0_34 = arith.constant 0 : index
      %c0_35 = arith.constant 0 : index
      %43 = vector.load %arg9[%c0_34, %c0_35] : memref<1x128xf32, #tpu.memory_space<vmem>>, vector<1x128xf32>
      %c0_36 = arith.constant 0 : index
      %c0_37 = arith.constant 0 : index
      %c0_38 = arith.constant 0 : index
      %44 = vector.load %arg6[%c0_36, %c0_37, %c0_38] : memref<1x1x128xf32, #tpu.memory_space<vmem>>, vector<1x1x128xf32>
      %45 = vector.shape_cast %44 : vector<1x1x128xf32> to vector<1x128xf32>
      %46 = vector.shape_cast %43 : vector<1x128xf32> to vector<1x1x128xf32>
      tpu.vector_store %arg6[%c0_36, %c0_37, %c0_38], %46 {strides = array<i32>} : memref<1x1x128xf32, #tpu.memory_space<vmem>>, vector<1x1x128xf32>,
    } else {
    }
    return
  }
  func.func @transform_0(%arg0: i32, %arg1: i32) -> (i32, i32, i32) {
    %c0_i32 = arith.constant 0 : i32
    %c0_i32_0 = arith.constant 0 : i32
    return %arg0, %arg1, %c0_i32 : i32, i32, i32
  }
  func.func @transform_1(%arg0: i32, %arg1: i32) -> (i32, i32, i32) {
    %c0_i32 = arith.constant 0 : i32
    %c0_i32_0 = arith.constant 0 : i32
    return %arg0, %arg1, %c0_i32 : i32, i32, i32
  }
  func.func @transform_2(%arg0: i32, %arg1: i32) -> (i32, i32, i32) {
    %c0_i32 = arith.constant 0 : i32
    %c0_i32_0 = arith.constant 0 : i32
    %c0_i32_1 = arith.constant 0 : i32
    return %arg0, %c0_i32, %c0_i32_0 : i32, i32, i32
  }
  func.func @transform_3(%arg0: i32, %arg1: i32) -> (i32, i32, i32) {
    %c0_i32 = arith.constant 0 : i32
    %c0_i32_0 = arith.constant 0 : i32
    %c0_i32_1 = arith.constant 0 : i32
    return %arg0, %c0_i32, %c0_i32_0 : i32, i32, i32
  }
  func.func @transform_4(%arg0: i32, %arg1: i32) -> (i32, i32, i32) {
    %c0_i32 = arith.constant 0 : i32
    %c0_i32_0 = arith.constant 0 : i32
    %c0_i32_1 = arith.constant 0 : i32
    return %arg0, %c0_i32, %c0_i32_0 : i32, i32, i32
  }
}

</mosaic_0001>

<llo_original>
// kernel: tpu_custom_call.1
$region0: #{tpu_custom_call.1}
  #allocation0 [shape = 'u32[]', space=smem, size = 0x4, offset = 0x4, fixed_abs, tag = 'smem constant byte address 0x4 - core index']
  #allocation1 [shape = 'u32[144,128]{1,0:T(1,128)}', space=vmem, size = 0x12000, scoped, tag = 'internal scratch']
  #allocation2 [shape = 'f32[1,128]{1,0:T(1,128)}', space=vmem, size = 0x200, scoped, tag = 'scratch operand']
  #allocation3 [shape = 'f32[1,128]{1,0:T(1,128)}', space=vmem, size = 0x200, scoped, tag = 'scratch operand']
  #allocation4 [shape = 'f32[1,128]{1,0:T(1,128)}', space=vmem, size = 0x200, scoped, tag = 'scratch operand']
  %s0 = inlined_call_operand.hbm [shape: f32[2,8,128], index: 0, kind: input, shape index: {}]
  %s1 = inlined_call_operand.hbm [shape: f32[2,8,128], index: 1, kind: input, shape index: {}]
  %s2 = inlined_call_operand.hbm [shape: f32[2,1,128], index: 2, kind: output, shape index: {0}]
  %s3 = inlined_call_operand.hbm [shape: f32[2,1,128], index: 3, kind: output, shape index: {1}]
  %s4 = inlined_call_operand.hbm [shape: f32[2,1,128], index: 4, kind: output, shape index: {2}]
  %5 = xla_tuple %s2, %s3, %s4
  %s6 = sld [smem:[#allocation0]]
  $region73: #{tpu_custom_call.1} parent=0
    _
  %s8 = ssub.s32 1, %s6
  %s9 = scalar_select 0, %s8, %s6
  $region1: #{tpu_custom_call.1} parent=0
    #allocation5 [shape = 'u8[8192]{0}', space=vmem, size = 0x2000, scoped, tag = 'input window, operand 0']
    #allocation6 [shape = 's32[2]{0}', space=sflag, size = 0x8, scoped, tag = 'scoped memory for tpu_custom_call.1']
    #allocation7 [shape = 's32[2]{0}', space=sflag, size = 0x8, scoped, tag = 'scoped memory for tpu_custom_call.1']
    #allocation8 [shape = 'u8[8192]{0}', space=vmem, size = 0x2000, scoped, tag = 'input window, operand 1']
    #allocation9 [shape = 's32[2]{0}', space=sflag, size = 0x8, scoped, tag = 'scoped memory for tpu_custom_call.1']
    #allocation10 [shape = 'u8[1024]{0}', space=vmem, size = 0x400, scoped, tag = 'output window, operand 0']
    #allocation11 [shape = 'u8[1024]{0}', space=vmem, size = 0x400, scoped, tag = 'output window, operand 1']
    #allocation12 [shape = 's32[2]{0}', space=sflag, size = 0x8, scoped, tag = 'scoped memory for tpu_custom_call.1']
    #allocation13 [shape = 'u8[1024]{0}', space=vmem, size = 0x400, scoped, tag = 'output window, operand 2']
    %10 = vsyncpa [#allocation6], 0
    %s11 = scalar_lea.sflag [#allocation6], 1
    %12 = vsyncpa %s11, 0
    %13 = vsyncpa [#allocation9], 0
    %s14 = scalar_lea.sflag [#allocation9], 1
    %15 = vsyncpa %s14, 0
    %16 = vsyncpa [#allocation7], 0
    %s17 = scalar_lea.sflag [#allocation7], 1
    %18 = vsyncpa %s17, 0
    %19 = vsyncpa [#allocation12], 0
    %s20 = scalar_lea.sflag [#allocation12], 1
    %21 = vsyncpa %s20, 0
    loop: start=0, step=1, limit=4
    $region2: #{tpu_custom_call.1} parent=1 // loop_pre_header
      _
    $region3: #{tpu_custom_call.1} parent=1 // loop_header
      %s23 = sphi 0, %s27
      %p24 = scmp.ge.s32.totalorder %s23, 4
      %s30 = sphi 0, %s42
      %s31 = sphi 0, %s38
      %s32 = sphi 0, %s30
      %s33 = sphi 0, %s31
      %s34 = sphi 0, %s32
      %s35 = sphi 0, %s33
      %s47 = sphi 0, %s49
      %s50 = sphi 0, %s47
      %s51 = sphi 0, %s50
      %s67 = sphi 0, %s51
      %s75 = sphi 0, %s77
      %s78 = sphi 0, %s75
      %s79 = sphi 0, %s78
      %s95 = sphi 0, %s79
      %s101 = sphi 0, %s103
      %s104 = sphi 0, %s101
      %s105 = sphi 0, %s104
      %s121 = sphi 0, %s105
      %s127 = sphi 0, %s129
      %s130 = sphi 0, %s127
      %s131 = sphi 0, %s130
      %s147 = sphi 0, %s131
      %s153 = sphi 0, %s155
      %s156 = sphi 0, %s153
      %s157 = sphi 0, %s156
      %s173 = sphi 0, %s157
    $region4: #{tpu_custom_call.1} parent=1 // loop_header_branch
      %26 = sbr.rel (%p24) target = $region8
    $region5: #{tpu_custom_call.1} parent=1 // loop_body
      %s28 = ssub.s32 %s23, 1
      %s29 = ssub.s32 %s23, 2
      %s36 = sadd.s32 1, %s31
      %p37 = scmp.ge.s32.totalorder %s36, 1
      %s38 = scalar_select %p37, 0, %s36
      %s39 = sadd.s32 1, %s30
      %s40 = scalar_select %p37, %s39, %s30
      %p41 = scmp.ge.s32.totalorder %s40, 2
      %s42 = scalar_select %p41, 0, %s40
      %s43 = ssub.s32 %s30, %s42
      %s44 = ssub.s32 %s31, %s38
      %s45 = sor.u32 %s43, %s44
      %p46 = scmp.eq.s32.totalorder %s45, 0
      %s48 = sadd.s32 %s47, 1
      %s49 = scalar_select %p46, %s47, %s48
      %p52 = pneg %p46
      %p53 = scmp.eq.s32.totalorder %s23, 1
      %p54 = por %p52, %p53
      %p55 = scmp.ne.s32.totalorder %s47, %s50
      %p56 = scmp.eq.s32.totalorder %s23, 0
      %p57 = por %p55, %p56
      %p58 = scmp.ne.s32.totalorder %s47, %s50
      %p59 = scmp.eq.s32.totalorder %s28, 1
      %p60 = por %p58, %p59
      %p61 = scmp.ne.s32.totalorder %s50, %s51
      %p62 = scmp.eq.s32.totalorder %s28, 0
      %p63 = por %p61, %p62
      %p64 = scmp.ne.s32.totalorder %s50, %s51
      %p65 = scmp.eq.s32.totalorder %s29, 1
      %p66 = por %p64, %p65
      %p68 = scmp.ne.s32.totalorder %s51, %s67
      %p69 = scmp.eq.s32.totalorder %s29, 0
      %p70 = por %p68, %p69
      %s71 = ssub.s32 %s30, %s42
      %s72 = ssub.s32 %s31, %s38
      %s73 = sor.u32 %s71, %s72
      %p74 = scmp.eq.s32.totalorder %s73, 0
      %s76 = sadd.s32 %s75, 1
      %s77 = scalar_select %p74, %s75, %s76
      %p80 = pneg %p74
      %p81 = scmp.eq.s32.totalorder %s23, 1
      %p82 = por %p80, %p81
      %p83 = scmp.ne.s32.totalorder %s75, %s78
      %p84 = scmp.eq.s32.totalorder %s23, 0
      %p85 = por %p83, %p84
      %p86 = scmp.ne.s32.totalorder %s75, %s78
      %p87 = scmp.eq.s32.totalorder %s28, 1
      %p88 = por %p86, %p87
      %p89 = scmp.ne.s32.totalorder %s78, %s79
      %p90 = scmp.eq.s32.totalorder %s28, 0
      %p91 = por %p89, %p90
      %p92 = scmp.ne.s32.totalorder %s78, %s79
      %p93 = scmp.eq.s32.totalorder %s29, 1
      %p94 = por %p92, %p93
      %p96 = scmp.ne.s32.totalorder %s79, %s95
      %p97 = scmp.eq.s32.totalorder %s29, 0
      %p98 = por %p96, %p97
      %s99 = ssub.s32 %s30, %s42
      %p100 = scmp.eq.s32.totalorder %s99, 0
      %s102 = sadd.s32 %s101, 1
      %s103 = scalar_select %p100, %s101, %s102
      %p106 = pneg %p100
      %p107 = scmp.eq.s32.totalorder %s23, 1
      %p108 = por %p106, %p107
      %p109 = scmp.ne.s32.totalorder %s101, %s104
      %p110 = scmp.eq.s32.totalorder %s23, 0
      %p111 = por %p109, %p110
      %p112 = scmp.ne.s32.totalorder %s101, %s104
      %p113 = scmp.eq.s32.totalorder %s28, 1
      %p114 = por %p112, %p113
      %p115 = scmp.ne.s32.totalorder %s104, %s105
      %p116 = scmp.eq.s32.totalorder %s28, 0
      %p117 = por %p115, %p116
      %p118 = scmp.ne.s32.totalorder %s104, %s105
      %p119 = scmp.eq.s32.totalorder %s29, 1
      %p120 = por %p118, %p119
      %p122 = scmp.ne.s32.totalorder %s105, %s121
      %p123 = scmp.eq.s32.totalorder %s29, 0
      %p124 = por %p122, %p123
      %s125 = ssub.s32 %s30, %s42
      %p126 = scmp.eq.s32.totalorder %s125, 0
      %s128 = sadd.s32 %s127, 1
      %s129 = scalar_select %p126, %s127, %s128
      %p132 = pneg %p126
      %p133 = scmp.eq.s32.totalorder %s23, 1
      %p134 = por %p132, %p133
      %p135 = scmp.ne.s32.totalorder %s127, %s130
      %p136 = scmp.eq.s32.totalorder %s23, 0
      %p137 = por %p135, %p136
      %p138 = scmp.ne.s32.totalorder %s127, %s130
      %p139 = scmp.eq.s32.totalorder %s28, 1
      %p140 = por %p138, %p139
      %p141 = scmp.ne.s32.totalorder %s130, %s131
      %p142 = scmp.eq.s32.totalorder %s28, 0
      %p143 = por %p141, %p142
      %p144 = scmp.ne.s32.totalorder %s130, %s131
      %p145 = scmp.eq.s32.totalorder %s29, 1
      %p146 = por %p144, %p145
      %p148 = scmp.ne.s32.totalorder %s131, %s147
      %p149 = scmp.eq.s32.totalorder %s29, 0
      %p150 = por %p148, %p149
      %s151 = ssub.s32 %s30, %s42
      %p152 = scmp.eq.s32.totalorder %s151, 0
      %s154 = sadd.s32 %s153, 1
      %s155 = scalar_select %p152, %s153, %s154
      %p158 = pneg %p152
      %p159 = scmp.eq.s32.totalorder %s23, 1
      %p160 = por %p158, %p159
      %p161 = scmp.ne.s32.totalorder %s153, %s156
      %p162 = scmp.eq.s32.totalorder %s23, 0
      %p163 = por %p161, %p162
      %p164 = scmp.ne.s32.totalorder %s153, %s156
      %p165 = scmp.eq.s32.totalorder %s28, 1
      %p166 = por %p164, %p165
      %p167 = scmp.ne.s32.totalorder %s156, %s157
      %p168 = scmp.eq.s32.totalorder %s28, 0
      %p169 = por %p167, %p168
      %p170 = scmp.ne.s32.totalorder %s156, %s157
      %p171 = scmp.eq.s32.totalorder %s29, 1
      %p172 = por %p170, %p171
      %p174 = scmp.ne.s32.totalorder %s157, %s173
      %p175 = scmp.eq.s32.totalorder %s29, 0
      %p176 = por %p174, %p175
      %p177 = scmp.le.s32.totalorder 1, %s23
      %p178 = scmp.lt.s32.totalorder %s23, 3
      %p179 = pnand %p177, %p178
      %p180 = pneg %p179
      // Predicated region
      $region9: #{tpu_custom_call.1} parent=5 // pred_check
        _
      $region10: #{tpu_custom_call.1} parent=5 // pred_check_branch
        %182 = sbr.rel (%p179) target = $region12
      $region11: #{tpu_custom_call.1} parent=5 // pred_region
        %s183 = ssub.s32 %s23, 1
      $region12: #{tpu_custom_call.1} parent=5 // pred_fallthru
        _
      %p184 = scmp.lt.s32.totalorder %s23, 2
      // Predicated region
      $region13: #{tpu_custom_call.1} parent=5 // pred_check
        %p185 = pneg %p184
      $region14: #{tpu_custom_call.1} parent=5 // pred_check_branch
        %187 = sbr.rel (%p185) target = $region16
      $region15: #{tpu_custom_call.1} parent=5 // pred_region
        // Predicated region
        $region17: #{tpu_custom_call.1} parent=15 // pred_check
          %p188 = pneg %p57
        $region18: #{tpu_custom_call.1} parent=15 // pred_check_branch
          %190 = sbr.rel (%p188) target = $region20
        $region19: #{tpu_custom_call.1} parent=15 // pred_region
          %s191 = sand.u32 %s47, 1
          %s192 = scalar_lea.sflag [#allocation6], %s191
          %s193 = sand.u32 %s47, 1
          %s194 = smul.addr %s193, 8
          %s195 = scalar_lea.vmem [#allocation5], %s194
          %s197 = ssub.s32 128, 128
          %198 = vsyncadd %s192, %s197
          %s199 = sadd.s32 %s31, %s30
          %s200 = smul.addr %s199, 128
          %s201 = scalar_lea.hbm %s0, %s200
          %s203 = sshll.u32 %s195, 4
          %s204 = int_to_ptr.vmem [resolvable:$true] %s203
          %206 = dma.hbm_to_vmem [thread:$0]  %s201, 128, %s204, %s192
        $region20: #{tpu_custom_call.1} parent=15 // pred_fallthru
          _
        // Predicated region
        $region21: #{tpu_custom_call.1} parent=15 // pred_check
          %p207 = pneg %p85
        $region22: #{tpu_custom_call.1} parent=15 // pred_check_branch
          %209 = sbr.rel (%p207) target = $region24
        $region23: #{tpu_custom_call.1} parent=15 // pred_region
          %s210 = sand.u32 %s75, 1
          %s211 = scalar_lea.sflag [#allocation9], %s210
          %s212 = sand.u32 %s75, 1
          %s213 = smul.addr %s212, 8
          %s214 = scalar_lea.vmem [#allocation8], %s213
          %s216 = ssub.s32 128, 128
          %217 = vsyncadd %s211, %s216
          %s218 = sadd.s32 %s31, %s30
          %s219 = smul.addr %s218, 128
          %s220 = scalar_lea.hbm %s1, %s219
          %s222 = sshll.u32 %s214, 4
          %s223 = int_to_ptr.vmem [resolvable:$true] %s222
          %225 = dma.hbm_to_vmem [thread:$0]  %s220, 128, %s223, %s211
        $region24: #{tpu_custom_call.1} parent=15 // pred_fallthru
          _
      $region16: #{tpu_custom_call.1} parent=5 // pred_fallthru
        _
      %p226 = scmp.le.s32.totalorder 1, %s23
      %p227 = scmp.lt.s32.totalorder %s23, 3
      %p228 = pnand %p226, %p227
      %p229 = pneg %p228
      // Predicated region
      $region25: #{tpu_custom_call.1} parent=5 // pred_check
        _
      $region26: #{tpu_custom_call.1} parent=5 // pred_check_branch
        %231 = sbr.rel (%p228) target = $region28
      $region27: #{tpu_custom_call.1} parent=5 // pred_region
        %s232 = ssub.s32 %s23, 1
        %s233 = sand.u32 %s50, 1
        %s234 = scalar_lea.sflag [#allocation6], %s233
        %s235 = sand.u32 %s50, 1
        %s236 = smul.addr %s235, 8
        %s237 = scalar_lea.vmem [#allocation5], %s236
        // Predicated region
        $region29: #{tpu_custom_call.1} parent=27 // pred_check
          %p238 = pneg %p63
        $region30: #{tpu_custom_call.1} parent=27 // pred_check_branch
          %240 = sbr.rel (%p238) target = $region32
        $region31: #{tpu_custom_call.1} parent=27 // pred_region
          %241 = dma.done %s234, 128
        $region32: #{tpu_custom_call.1} parent=27 // pred_fallthru
          _
        %s242 = sand.u32 %s78, 1
        %s243 = scalar_lea.sflag [#allocation9], %s242
        %s244 = sand.u32 %s78, 1
        %s245 = smul.addr %s244, 8
        %s246 = scalar_lea.vmem [#allocation8], %s245
        // Predicated region
        $region33: #{tpu_custom_call.1} parent=27 // pred_check
          %p247 = pneg %p91
        $region34: #{tpu_custom_call.1} parent=27 // pred_check_branch
          %249 = sbr.rel (%p247) target = $region36
        $region35: #{tpu_custom_call.1} parent=27 // pred_region
          %250 = dma.done %s243, 128
        $region36: #{tpu_custom_call.1} parent=27 // pred_fallthru
          _
        %s251 = sand.u32 %s50, 1
        %s252 = scalar_lea.sflag [#allocation6], %s251
        %s253 = sand.u32 %s50, 1
        %s254 = smul.addr %s253, 8
        %s255 = scalar_lea.vmem [#allocation5], %s254
        %p256 = pneg %p63
        %p257 = pneg %p60
        %s258 = sand.u32 %s78, 1
        %s259 = scalar_lea.sflag [#allocation9], %s258
        %s260 = sand.u32 %s78, 1
        %s261 = smul.addr %s260, 8
        %s262 = scalar_lea.vmem [#allocation8], %s261
        %p263 = pneg %p91
        %p264 = pneg %p88
        %p265 = pneg %p117
        %p266 = pneg %p114
        %s267 = sand.u32 %s104, 1
        %s268 = scalar_lea.sflag [#allocation7], %s267
        %s269 = sand.u32 %s104, 1
        %s270 = scalar_lea.vmem [#allocation10], %s269
        %p271 = pneg %p143
        %p272 = pneg %p140
        %s273 = sand.u32 %s28, 1
        %s274 = scalar_lea.sflag [#allocation12], %s273
        %s275 = sand.u32 %s130, 1
        %s276 = scalar_lea.vmem [#allocation11], %s275
        %p277 = pneg %p169
        %p278 = pneg %p166
        %s279 = sand.u32 %s28, 1
        %s280 = scalar_lea.sflag [#allocation12], %s279
        %s281 = sand.u32 %s156, 1
        %s282 = scalar_lea.vmem [#allocation13], %s281
        %p283 = scmp.eq.s32.totalorder %s33, 0
        // Predicated region
        $region37: #{tpu_custom_call.1} parent=27 // pred_check
          %p284 = pneg %p283
        $region38: #{tpu_custom_call.1} parent=27 // pred_check_branch
          %286 = sbr.rel (%p284) target = $region40
        $region39: #{tpu_custom_call.1} parent=27 // pred_region
          %287 = vst [vmem:[#allocation2] sm:$0x1] 0.0
          %288 = vst [vmem:[#allocation3] sm:$0x1] 0.0
          %289 = vst [vmem:[#allocation4] sm:$0x1] 0.0
        $region40: #{tpu_custom_call.1} parent=27 // pred_fallthru
          _
        %v290 = vld [vmem:[%s237] sm:$0xff]
        %v291 = vld [vmem:[%s246] sm:$0xff]
        %v292 = vxor.u32 %v290, 2147483648
        %v293 = vmul.f32 %v292, 1.442695
        %v294 = vpow.pop %v293
        %v295 = vadd.f32 %v294, 1.0
        %v296 = vrcp.pop %v295
        %v297 = vmul.f32 1.0, %v296
        %vm298 = vcmp.gt.f32.partialorder %v297, 0.5
        %v299 = vsel %vm298, 1, 0
        %v300 = vcvt.s32.f32 %v299
        %v301 = vmul.f32 %v300, %v291
        %v302 = vld [vmem:[#allocation2] sm:$0x1]
        %v303 = vrot.slane %v301, 4
        %v304 = vadd.f32 %v301, %v303
        %v305 = vrot.slane %v304, 2
        %v306 = vadd.f32 %v304, %v305
        %v307 = vrot.slane %v306, 1
        %v308 = vadd.f32 %v306, %v307
        %v309 = vadd.f32 %v302, %v308
        %310 = vst [vmem:[#allocation2] sm:$0x1] %v309
        %v311 = vld [vmem:[#allocation3] sm:$0x1]
        %v312 = vrot.slane %v300, 4
        %v313 = vadd.f32 %v300, %v312
        %v314 = vrot.slane %v313, 2
        %v315 = vadd.f32 %v313, %v314
        %v316 = vrot.slane %v315, 1
        %v317 = vadd.f32 %v315, %v316
        %v318 = vadd.f32 %v311, %v317
        %319 = vst [vmem:[#allocation3] sm:$0x1] %v318
        %v320 = vld [vmem:[#allocation4] sm:$0x1]
        %v321 = vrot.slane %v291, 4
        %v322 = vadd.f32 %v291, %v321
        %v323 = vrot.slane %v322, 2
        %v324 = vadd.f32 %v322, %v323
        %v325 = vrot.slane %v324, 1
        %v326 = vadd.f32 %v324, %v325
        %v327 = vadd.f32 %v320, %v326
        %328 = vst [vmem:[#allocation4] sm:$0x1] %v327
        // Predicated region
        $region41: #{tpu_custom_call.1} parent=27 // pred_check
          %p329 = pneg %p283
        $region42: #{tpu_custom_call.1} parent=27 // pred_check_branch
          %331 = sbr.rel (%p329) target = $region44
        $region43: #{tpu_custom_call.1} parent=27 // pred_region
          %v332 = vld [vmem:[#allocation2] sm:$0x1]
          %333 = vst [vmem:[%s270] sm:$0x1] %v332
          %v334 = vld [vmem:[#allocation3] sm:$0x1]
          %335 = vst [vmem:[%s276] sm:$0x1] %v334
          %v336 = vld [vmem:[#allocation4] sm:$0x1]
          %337 = vst [vmem:[%s282] sm:$0x1] %v336
        $region44: #{tpu_custom_call.1} parent=27 // pred_fallthru
          _
        %s338 = sand.u32 %s104, 1
        %s339 = scalar_lea.sflag [#allocation7], %s338
        %s340 = sand.u32 %s104, 1
        %s341 = scalar_lea.vmem [#allocation10], %s340
        %s342 = sand.u32 %s28, 1
        %s343 = scalar_lea.sflag [#allocation12], %s342
        %s344 = sand.u32 %s130, 1
        %s345 = scalar_lea.vmem [#allocation11], %s344
        %s346 = sand.u32 %s28, 1
        %s347 = scalar_lea.sflag [#allocation12], %s346
        %s348 = sand.u32 %s156, 1
        %s349 = scalar_lea.vmem [#allocation13], %s348
        // Predicated region
        $region45: #{tpu_custom_call.1} parent=27 // pred_check
          %p350 = pneg %p114
        $region46: #{tpu_custom_call.1} parent=27 // pred_check_branch
          %352 = sbr.rel (%p350) target = $region48
        $region47: #{tpu_custom_call.1} parent=27 // pred_region
          %s354 = ssub.s32 16, 16
          %355 = vsyncadd %s339, %s354
          %s356 = smul.addr %s32, 16
          %s357 = scalar_lea.hbm %s2, %s356
          %s359 = sshll.u32 %s341, 4
          %s360 = int_to_ptr.vmem [resolvable:$true] %s359
          %362 = dma.vmem_to_hbm [thread:$0]  %s360, 16, %s357, %s339
        $region48: #{tpu_custom_call.1} parent=27 // pred_fallthru
          _
        // Predicated region
        $region49: #{tpu_custom_call.1} parent=27 // pred_check
          %p363 = pneg %p140
        $region50: #{tpu_custom_call.1} parent=27 // pred_check_branch
          %365 = sbr.rel (%p363) target = $region52
        $region51: #{tpu_custom_call.1} parent=27 // pred_region
          %s367 = ssub.s32 16, 16
          %368 = vsyncadd %s343, %s367
          %s369 = smul.addr %s32, 16
          %s370 = scalar_lea.hbm %s3, %s369
          %s372 = sshll.u32 %s345, 4
          %s373 = int_to_ptr.vmem [resolvable:$true] %s372
          %375 = dma.vmem_to_hbm [thread:$0]  %s373, 16, %s370, %s343
        $region52: #{tpu_custom_call.1} parent=27 // pred_fallthru
          _
        // Predicated region
        $region53: #{tpu_custom_call.1} parent=27 // pred_check
          %p376 = pneg %p166
        $region54: #{tpu_custom_call.1} parent=27 // pred_check_branch
          %378 = sbr.rel (%p376) target = $region56
        $region55: #{tpu_custom_call.1} parent=27 // pred_region
          %s380 = ssub.s32 16, 16
          %381 = vsyncadd %s347, %s380
          %s382 = smul.addr %s32, 16
          %s383 = scalar_lea.hbm %s4, %s382
          %s385 = sshll.u32 %s349, 4
          %s386 = int_to_ptr.vmem [resolvable:$true] %s385
          %388 = dma.vmem_to_hbm [thread:$0]  %s386, 16, %s383, %s347
        $region56: #{tpu_custom_call.1} parent=27 // pred_fallthru
          _
      $region28: #{tpu_custom_call.1} parent=5 // pred_fallthru
        _
      %p389 = scmp.le.s32.totalorder 2, %s23
      // Predicated region
      $region57: #{tpu_custom_call.1} parent=5 // pred_check
        %p390 = pneg %p389
      $region58: #{tpu_custom_call.1} parent=5 // pred_check_branch
        %392 = sbr.rel (%p390) target = $region60
      $region59: #{tpu_custom_call.1} parent=5 // pred_region
        %s393 = ssub.s32 %s23, 2
        // Predicated region
        $region61: #{tpu_custom_call.1} parent=59 // pred_check
          %p394 = pneg %p120
        $region62: #{tpu_custom_call.1} parent=59 // pred_check_branch
          %396 = sbr.rel (%p394) target = $region64
        $region63: #{tpu_custom_call.1} parent=59 // pred_region
          %s397 = sand.u32 %s105, 1
          %s398 = scalar_lea.sflag [#allocation7], %s397
          %s399 = sand.u32 %s105, 1
          %s400 = scalar_lea.vmem [#allocation10], %s399
          %401 = dma.done %s398, 16
        $region64: #{tpu_custom_call.1} parent=59 // pred_fallthru
          _
        // Predicated region
        $region65: #{tpu_custom_call.1} parent=59 // pred_check
          %p402 = pneg %p146
        $region66: #{tpu_custom_call.1} parent=59 // pred_check_branch
          %404 = sbr.rel (%p402) target = $region68
        $region67: #{tpu_custom_call.1} parent=59 // pred_region
          %s405 = sand.u32 %s29, 1
          %s406 = scalar_lea.sflag [#allocation12], %s405
          %s407 = sand.u32 %s131, 1
          %s408 = scalar_lea.vmem [#allocation11], %s407
          %409 = dma.done %s406, 16
        $region68: #{tpu_custom_call.1} parent=59 // pred_fallthru
          _
        // Predicated region
        $region69: #{tpu_custom_call.1} parent=59 // pred_check
          %p410 = pneg %p172
        $region70: #{tpu_custom_call.1} parent=59 // pred_check_branch
          %412 = sbr.rel (%p410) target = $region72
        $region71: #{tpu_custom_call.1} parent=59 // pred_region
          %s413 = sand.u32 %s29, 1
          %s414 = scalar_lea.sflag [#allocation12], %s413
          %s415 = sand.u32 %s157, 1
          %s416 = scalar_lea.vmem [#allocation13], %s415
          %417 = dma.done %s414, 16
        $region72: #{tpu_custom_call.1} parent=59 // pred_fallthru
          _
      $region60: #{tpu_custom_call.1} parent=5 // pred_fallthru
        _
    $region6: #{tpu_custom_call.1} parent=1 // loop_footer
      %s27 = sadd.s32 1, %s23
    $region7: #{tpu_custom_call.1} parent=1 // loop_footer_branch
      %22 = sbr.rel target = $region3
    $region8: #{tpu_custom_call.1} parent=1 // loop_exit
      _
    %418 = vsyncpa [#allocation6], 1
    %s419 = scalar_lea.sflag [#allocation6], 1
    %420 = vsyncpa %s419, 1
    %421 = vsyncpa [#allocation9], 1
    %s422 = scalar_lea.sflag [#allocation9], 1
    %423 = vsyncpa %s422, 1
    %424 = vsyncpa [#allocation7], 1
    %s425 = scalar_lea.sflag [#allocation7], 1
    %426 = vsyncpa %s425, 1
    %427 = vsyncpa [#allocation12], 1
    %s428 = scalar_lea.sflag [#allocation12], 1
    %429 = vsyncpa %s428, 1

</llo_original>
